<compile_context>
chip_gen: v5e
topology: v5e:2x2
jax: 0.10.0
libtpu: 0.0.40
codegen_flags: <defaults>
</compile_context>

<pallas_src>
import functools

import jax
import jax.numpy as jnp
from jax.experimental import pallas as pl
from jax.experimental.pallas import tpu as pltpu


def _cdiv(a, b):
    return -(-a // b)


def _round_up8(x):
    return ((x + 7) // 8) * 8


def _row_losses(pred_ref, labels_ref):
    """Per-row -log(1 - softmax(x)[label]) for the current (TILE_N, C) tile."""
    x = pred_ref[...]                                     # (T, C), native dtype
    labels = labels_ref[...]                              # (T, 1), int32

    # Row max on the native dtype (exact for max; packed bf16 halves VPU cost),
    # f32 cast folded into the exp argument (no standalone f32 copy kept live).
    m = jnp.max(x, axis=1, keepdims=True)                 # (T, 1), native
    e = jnp.exp(x.astype(jnp.float32) - m.astype(jnp.float32))   # (T, C) f32
    s = jnp.sum(e, axis=1, keepdims=True)                 # (T, 1)

    # One-hot label mask via a (1, C) iota broadcast against (T, 1) labels.
    class_ids = jax.lax.broadcasted_iota(jnp.int32, (1, x.shape[1]), 1)
    is_label = class_ids == labels                        # (T, C) bool
    e_label = jnp.sum(jnp.where(is_label, e, jnp.float32(0.0)),
                      axis=1, keepdims=True)              # (T, 1)

    # -log(1 - p_label) = -log1p(-e_label / s)
    p_label = e_label / s
    return -jnp.log1p(-p_label)                           # (T, 1) f32


def _nl_loss_rows_kernel(pred_ref, labels_ref, out_ref):
    # Per-row losses; Pallas clips the stores of the partial last block.
    out_ref[...] = _row_losses(pred_ref, labels_ref)


def _nl_loss_mean_kernel(pred_ref, labels_ref, out_ref, *, n_rows):
    loss = _row_losses(pred_ref, labels_ref)              # (T, 1) f32
    tile_n = loss.shape[0]
    # Mask tail rows of the (possibly partial) last block before summing.
    row_ids = (pl.program_id(0) * tile_n
               + jax.lax.broadcasted_iota(jnp.int32, (tile_n, 1), 0))
    valid = row_ids < n_rows
    part = jnp.sum(jnp.where(valid, loss, jnp.float32(0.0)))
    # Lane-dense (1, 128) partial-sum slab per block (unmasked full-lane vst).
    out_ref[...] = jnp.full((1, 128), part, dtype=jnp.float32)


def _choose_tile_n(n, c, itemsize):
    """Rows per block, sized by the *live* per-step VMEM working set.

    Per element of the pred tile:
      2 * itemsize  double-buffered native input (BlockSpec pipelining)
      ~12 B         f32 intermediates (exp result, masked copy, compare/select)
    Target ~8 MiB live -> comfortably inside v7x's 64 MiB VMEM (40 MiB scoped
    limit), trivially inside v5e/v6e's 128 MiB.
    """
    budget_bytes = 8 * 1024 * 1024
    bytes_per_row = c * (2 * itemsize + 12)
    t = budget_bytes // max(1, bytes_per_row)
    # 512-row tiles already reach ~85% of the HBM roofline; capping here keeps
    # multiple grid steps (pipelining + both v7x TensorCores) for large N.
    t = min(t, 512)
    t = min(t, _round_up8(n))
    t = max(8, (t // 8) * 8)
    # Prefer >= 2 blocks (DMA/compute overlap, 2nd TensorCore on v7x) ...
    if _cdiv(n, t) == 1 and n > 8:
        t = max(8, _round_up8(_cdiv(n, 2)))
    # ... and an even number of blocks so the "parallel" axis splits evenly
    # across v7x's two TensorCores.
    nb = _cdiv(n, t)
    if nb > 1 and nb % 2 == 1:
        t_even = max(8, _round_up8(_cdiv(n, nb + 1)))
        if _cdiv(n, t_even) % 2 == 0:
            t = t_even
    return t


def nl_loss(pred, labels, reduction="mean", tile_n=None):
    """Pallas NL loss. pred: (N, C) float (any dtype), labels: (N,) int."""
    n, c = pred.shape
    itemsize = jnp.dtype(pred.dtype).itemsize
    if tile_n is None:
        tile_n = _choose_tile_n(n, c, itemsize)

    n_blocks = pl.cdiv(n, tile_n)
    labels2d = labels.astype(jnp.int32).reshape(n, 1)

    in_specs = [
        pl.BlockSpec((tile_n, c), lambda i: (i, 0)),
        pl.BlockSpec((tile_n, 1), lambda i: (i, 0)),
    ]
    compiler_params = pltpu.CompilerParams(
        dimension_semantics=("parallel",),
        vmem_limit_bytes=40 * 1024 * 1024,   # <= ~48 MiB for v7x, ample on v5e/v6e
    )
    in_bytes = n * c * itemsize + n * 4

    if reduction == "mean":
        out = pl.pallas_call(
            functools.partial(_nl_loss_mean_kernel, n_rows=n),
            out_shape=jax.ShapeDtypeStruct((1, n_blocks * 128), jnp.float32),
            grid=(n_blocks,),
            in_specs=in_specs,
            out_specs=pl.BlockSpec((1, 128), lambda i: (0, i)),
            compiler_params=compiler_params,
            cost_estimate=pl.CostEstimate(
                flops=6 * n * c,
                transcendentals=n * c + n,
                bytes_accessed=in_bytes + n_blocks * 128 * 4,
            ),
        )(pred, labels2d)
        partials = out.reshape(n_blocks, 128)[:, 0]       # lane 0 of each slab
        return jnp.sum(partials) / jnp.float32(n)

    per_row = pl.pallas_call(
        _nl_loss_rows_kernel,
        out_shape=jax.ShapeDtypeStruct((n, 1), jnp.float32),
        grid=(n_blocks,),
        in_specs=in_specs,
        out_specs=pl.BlockSpec((tile_n, 1), lambda i: (i, 0)),
        compiler_params=compiler_params,
        cost_estimate=pl.CostEstimate(
            flops=6 * n * c,
            transcendentals=n * c + n,
            bytes_accessed=in_bytes + n * 4,
        ),
    )(pred, labels2d)
    return per_row[:, 0]


def _nl_loss_ref(pred, labels, num_classes, reduction="mean"):
    p = jax.nn.softmax(pred.astype(jnp.float32), axis=1)
    oh = jax.nn.one_hot(labels, num_classes, dtype=jnp.float32)
    per = -jnp.sum(oh * jnp.log(1.0 - p), axis=1)
    return jnp.mean(per) if reduction == "mean" else per


if __name__ == "__main__":
    key = jax.random.PRNGKey(0)
    k1, k2, k3, k4 = jax.random.split(key, 4)

    # --- small case (module's intended shapes): N=8, C=32, f32 ---
    N, C = 8, 32
    pred = jax.random.normal(k1, (N, C), dtype=jnp.float32)
    labels = jax.random.randint(k2, (N,), 0, C, dtype=jnp.int32)

    loss = jax.block_until_ready(nl_loss(pred, labels, reduction="mean"))
    ref = _nl_loss_ref(pred, labels, C)
    assert jnp.allclose(loss, ref, atol=2e-5, rtol=1e-5), (loss, ref)

    per = jax.block_until_ready(nl_loss(pred, labels, reduction="none"))
    per_ref = _nl_loss_ref(pred, labels, C, reduction="none")
    assert jnp.allclose(per, per_ref, atol=2e-5, rtol=1e-5), (per, per_ref)

    # --- ragged N (partial last block, no wrapper pad), bf16, multi-step grid ---
    N2, C2 = 300, 96
    pred2 = jax.random.normal(k3, (N2, C2), dtype=jnp.bfloat16)
    labels2 = jax.random.randint(k4, (N2,), 0, C2, dtype=jnp.int32)
    ref2 = _nl_loss_ref(pred2, labels2, C2)
    per_ref2 = _nl_loss_ref(pred2, labels2, C2, reduction="none")

    # auto tile (even-#blocks path) and explicit tile with a partial tail block
    loss2a = jax.block_until_ready(nl_loss(pred2, labels2, reduction="mean"))
    loss2b = jax.block_until_ready(
        nl_loss(pred2, labels2, reduction="mean", tile_n=64))
    per2 = jax.block_until_ready(
        nl_loss(pred2, labels2, reduction="none", tile_n=64))
    assert jnp.allclose(loss2a, ref2, atol=1e-3, rtol=1e-3), (loss2a, ref2)
    assert jnp.allclose(loss2b, ref2, atol=1e-3, rtol=1e-3), (loss2b, ref2)
    assert jnp.allclose(per2, per_ref2, atol=1e-3, rtol=1e-3), (per2, per_ref2)

    print("KERNEL_OK")
</pallas_src>

<mosaic_0001>
module attributes {stable_mosaic.version = 11 : i64} {
  func.func @_nl_loss_mean_kernel(%arg0: i32, %arg1: memref<8x32xf32, #tpu.memory_space<vmem>>, %arg2: memref<8x1xi32, #tpu.memory_space<vmem>>, %arg3: memref<1x128xf32, #tpu.memory_space<vmem>>) attributes {dimension_semantics = [#tpu.dimension_semantics<parallel>], iteration_bounds = array<i64: 1>, scalar_prefetch = 0 : i64, scratch_operands = 0 : i64, tpu.core_type = #tpu.core_type<tc>, window_params = [{transform_indices = @transform_0, window_bounds = array<i64: 8, 32>}, {transform_indices = @transform_1, window_bounds = array<i64: 8, 1>}, {transform_indices = @transform_2, window_bounds = array<i64: 1, 128>}]} {
    %c0 = arith.constant 0 : index
    %c0_0 = arith.constant 0 : index
    %0 = vector.load %arg1[%c0, %c0_0] : memref<8x32xf32, #tpu.memory_space<vmem>>, vector<8x32xf32>
    %c0_1 = arith.constant 0 : index
    %c0_2 = arith.constant 0 : index
    %1 = vector.load %arg2[%c0_1, %c0_2] : memref<8x1xi32, #tpu.memory_space<vmem>>, vector<8x1xi32>
    %cst = arith.constant dense<0xFF800000> : vector<8xf32>
    %2 = vector.multi_reduction <maximumf>, %0, %cst [1] : vector<8x32xf32> to vector<8xf32>
    %3 = vector.shape_cast %2 : vector<8xf32> to vector<8x1xf32>
    %4 = vector.broadcast %3 : vector<8x1xf32> to vector<8x32xf32>
    %5 = arith.subf %0, %4 : vector<8x32xf32>
    %6 = math.exp %5 : vector<8x32xf32>
    %cst_3 = arith.constant dense<0.000000e+00> : vector<8xf32>
    %7 = vector.multi_reduction <add>, %6, %cst_3 [1] : vector<8x32xf32> to vector<8xf32>
    %8 = vector.shape_cast %7 : vector<8xf32> to vector<8x1xf32>
    %9 = tpu.iota {dimensions = array<i32: 1>} : vector<1x32xi32>
    %10 = vector.broadcast %9 : vector<1x32xi32> to vector<8x32xi32>
    %11 = vector.broadcast %1 : vector<8x1xi32> to vector<8x32xi32>
    %12 = arith.cmpi eq, %10, %11 : vector<8x32xi32>
    %cst_4 = arith.constant 0.000000e+00 : f32
    %13 = vector.broadcast %cst_4 : f32 to vector<8x32xf32>
    %14 = arith.select %12, %6, %13 : vector<8x32xi1>, vector<8x32xf32>
    %cst_5 = arith.constant dense<0.000000e+00> : vector<8xf32>
    %15 = vector.multi_reduction <add>, %14, %cst_5 [1] : vector<8x32xf32> to vector<8xf32>
    %16 = vector.shape_cast %15 : vector<8xf32> to vector<8x1xf32>
    %17 = arith.divf %16, %8 : vector<8x1xf32>
    %cst_6 = arith.constant 0.000000e+00 : f32
    %18 = vector.broadcast %cst_6 : f32 to vector<8x1xf32>
    %19 = arith.subf %18, %17 : vector<8x1xf32>
    %20 = math.log1p %19 : vector<8x1xf32>
    %cst_7 = arith.constant 0.000000e+00 : f32
    %21 = vector.broadcast %cst_7 : f32 to vector<8x1xf32>
    %22 = arith.subf %21, %20 : vector<8x1xf32>
    %c8_i32 = arith.constant 8 : i32
    %23 = arith.muli %arg0, %c8_i32 : i32
    %24 = tpu.iota {dimensions = array<i32: 0>} : vector<8x1xi32>
    %25 = vector.broadcast %23 : i32 to vector<8x1xi32>
    %26 = arith.addi %25, %24 : vector<8x1xi32>
    %c8_i32_8 = arith.constant 8 : i32
    %27 = vector.broadcast %c8_i32_8 : i32 to vector<8x1xi32>
    %28 = arith.cmpi slt, %26, %27 : vector<8x1xi32>
    %cst_9 = arith.constant 0.000000e+00 : f32
    %29 = vector.broadcast %cst_9 : f32 to vector<8x1xf32>
    %30 = arith.select %28, %22, %29 : vector<8x1xi1>, vector<8x1xf32>
    %31 = vector.shape_cast %30 : vector<8x1xf32> to vector<1x8x1xf32>
    %cst_10 = arith.constant dense<0.000000e+00> : vector<1xf32>
    %32 = vector.multi_reduction <add>, %31, %cst_10 [1, 2] : vector<1x8x1xf32> to vector<1xf32>
    %33 = vector.shape_cast %32 : vector<1xf32> to vector<1x1x1xf32>
    %34 = vector.extract %33[0, 0, 0] : f32 from vector<1x1x1xf32>
    %35 = vector.broadcast %34 : f32 to vector<1x128xf32>
    %c0_11 = arith.constant 0 : index
    %c0_12 = arith.constant 0 : index
    %36 = vector.load %arg3[%c0_11, %c0_12] : memref<1x128xf32, #tpu.memory_space<vmem>>, vector<1x128xf32>
    tpu.vector_store %arg3[%c0_11, %c0_12], %35 {strides = array<i32>} : memref<1x128xf32, #tpu.memory_space<vmem>>, vector<1x128xf32>,
    return
  }
  func.func @transform_0(%arg0: i32) -> (i32, i32) {
    %c0_i32 = arith.constant 0 : i32
    %c0_i32_0 = arith.constant 0 : i32
    return %arg0, %c0_i32 : i32, i32
  }
  func.func @transform_1(%arg0: i32) -> (i32, i32) {
    %c0_i32 = arith.constant 0 : i32
    %c0_i32_0 = arith.constant 0 : i32
    return %arg0, %c0_i32 : i32, i32
  }
  func.func @transform_2(%arg0: i32) -> (i32, i32) {
    %c0_i32 = arith.constant 0 : i32
    %c0_i32_0 = arith.constant 0 : i32
    return %c0_i32, %arg0 : i32, i32
  }
}

</mosaic_0001>

<llo_original>
// kernel: tpu_custom_call.1
$region0: #{tpu_custom_call.1}
  #allocation0 [shape = 'u32[]', space=smem, size = 0x4, offset = 0x4, fixed_abs, tag = 'smem constant byte address 0x4 - core index']
  #allocation1 [shape = 'u32[72,128]{1,0:T(1,128)}', space=vmem, size = 0x9000, scoped, tag = 'internal scratch']
  %s0 = inlined_call_operand.vmem [shape: f32[8,32], index: 0, kind: input, shape index: {}]
  %s1 = inlined_call_operand.vmem [shape: s32[8,1], index: 1, kind: input, shape index: {}]
  %s2 = inlined_call_operand.hbm [shape: f32[1,128], index: 2, kind: output, shape index: {}]
  %s3 = sld [smem:[#allocation0]]
  $region18: #{tpu_custom_call.1} parent=0
    _
  %s5 = ssub.s32 1, %s3
  %s6 = scalar_select 0, %s5, %s3
  $region1: #{tpu_custom_call.1} parent=0
    #allocation2 [shape = 'u8[512]{0}', space=vmem, size = 0x400, scoped, tag = 'output window, operand 0, single buffered']
    #allocation3 [shape = 's32[1]{0}', space=sflag, size = 0x4, scoped, tag = 'scoped memory for tpu_custom_call.1']
    %7 = vsyncpa [#allocation3], 0
    // Predicated region
    $region2: #{tpu_custom_call.1} parent=1 // pred_check
      _
    $region3: #{tpu_custom_call.1} parent=1 // pred_check_branch
      %9 = sbr.rel (0) target = $region5
    $region4: #{tpu_custom_call.1} parent=1 // pred_region
      _
    $region5: #{tpu_custom_call.1} parent=1 // pred_fallthru
      _
    // Predicated region
    $region6: #{tpu_custom_call.1} parent=1 // pred_check
      _
    $region7: #{tpu_custom_call.1} parent=1 // pred_check_branch
      %11 = sbr.rel (0) target = $region9
    $region8: #{tpu_custom_call.1} parent=1 // pred_region
      _
    $region9: #{tpu_custom_call.1} parent=1 // pred_fallthru
      _
    %v12 = vld [vmem:[%s0] sm:$0xff]
    %v13 = vld [vmem:[%s1] sm:$0xff]
    %vm14 = vcmask 261120
    %v15 = vsel %vm14, %v12, -inf
    %16 = vmax.xlane.f32.xlu0 %v15
    %v17 = vpop.xlane.xlu0 %16
    %v18 = vsub.f32 %v12, %v17
    %v19 = vmul.f32 %v18, 1.442695
    %v20 = vpow.pop %v19
    %v21 = vsel %vm14, %v20, 0.0
    %22 = vadd.xlane.f32.xlu0 %v21
    %v23 = vpop.xlane.xlu0 %22
    %v24 = vlaneseq
    %v25 = vand.u32 %v24, 127
    %26 = vset.pattern.permute.xlu0 0
    %27 = vperm.xlu0 %26, %v13
    %v28 = vpop.permute.xlu0 %27
    %vm29 = vcmp.eq.s32.totalorder %v25, %v28
    %v30 = vsel %vm29, %v20, 0.0
    %v31 = vsel %vm14, %v30, 0.0
    %32 = vadd.xlane.f32.xlu0 %v31
    %v33 = vpop.xlane.xlu0 %32
    %v34 = vrcp.pop %v23
    %v35 = vmul.f32 %v23, %v34
    %v36 = vsub.f32 1.0, %v35
    %v37 = vmul.f32 %v34, %v36
    %v38 = vadd.f32 %v34, %v37
    %vm39 = vweird.f32 %v23
    %vm40 = vweird.f32 %v34
    %vm41 = vmor %vm39, %vm40
    %v42 = vsel %vm41, %v34, %v38
    %v43 = vand.u32 2147483647, %v23
    %vm44 = vcmp.eq.f32.partialorder %v43, 8.507059e+37
    %v45 = vand.u32 %v23, 2147483648
    %v46 = vor.u32 1.1754944e-38, %v45
    %v47 = vsel %vm44, %v46, %v42
    %v48 = vmul.f32 %v33, %v47
    %v49 = vsub.f32 0.0, %v48
    %v50 = vadd.f32 %v49, 1.0
    %v51 = vlog2.pop %v50
    %v52 = vmul.f32 %v51, 0.6931472
    %v53 = vmul.f32 -0.5, %v49
    %v54 = vadd.f32 %v53, 1.0
    %v55 = vmul.f32 %v54, %v49
    %v56 = vand.u32 2147483647, %v49
    %vm57 = vcmp.lt.f32.partialorder %v56, 0.0004427343
    %v58 = vsel %vm57, %v55, %v52
    %v59 = vsub.f32 0.0, %v58
    %s60 = smul.u32 0, 8
    %v61 = vlaneseq
    %v62 = vshrl.u32 %v61, 7
    %v63 = vstv %s60
    %v64 = vadd.s32 %v63, %v62
    %vm65 = vcmp.lt.s32.totalorder %v64, 8
    %v66 = vsel %vm65, %v59, 0.0
    %vm67 = vcmask 7168
    %v68 = vsel %vm67, %v66, 0.0
    %69 = vadd.xlane.f32.xlu0 %v68
    %v70 = vpop.xlane.xlu0 %69
    %v71 = vrot.slane %v70, 4
    %v72 = vadd.f32 %v70, %v71
    %v73 = vrot.slane %v72, 2
    %v74 = vadd.f32 %v72, %v73
    %v75 = vrot.slane %v74, 1
    %v76 = vadd.f32 %v74, %v75
    %s77 = vtos %v76
    %v78 = vstv %s77
    %79 = vst [vmem:[#allocation2] sm:$0x1] %v78
    // Predicated region
    $region10: #{tpu_custom_call.1} parent=1 // pred_check
      _
    $region11: #{tpu_custom_call.1} parent=1 // pred_check_branch
      %81 = sbr.rel (0) target = $region13
    $region12: #{tpu_custom_call.1} parent=1 // pred_region
      %83 = vsyncadd [#allocation3], 0
      %s85 = sshll.u32 [#allocation2], 4
      %s86 = int_to_ptr.vmem [resolvable:$true] %s85
      %s87 = sshll.u32 %s2, 4
      %s88 = int_to_ptr.hbm [resolvable:$true] %s87
      %90 = dma.vmem_to_hbm [thread:$0]  %s86, 16, %s88, [#allocation3]
    $region13: #{tpu_custom_call.1} parent=1 // pred_fallthru
      _
    // Predicated region
    $region14: #{tpu_custom_call.1} parent=1 // pred_check
      _
    $region15: #{tpu_custom_call.1} parent=1 // pred_check_branch
      %92 = sbr.rel (0) target = $region17
    $region16: #{tpu_custom_call.1} parent=1 // pred_region
      %94 = dma.done [#allocation3], 16
    $region17: #{tpu_custom_call.1} parent=1 // pred_fallthru
      _
    %95 = vsyncpa [#allocation3], 1

</llo_original>
